<compile_context>
chip_gen: v7x
topology: tpu7x:2x2x1
jax: 0.10.0
libtpu: 0.0.40
codegen_flags: <defaults>
</compile_context>

<pallas_src>
import functools

import numpy as np

import jax
import jax.numpy as jnp
from jax.experimental import pallas as pl
from jax.experimental.pallas import tpu as pltpu

EPS = 1e-5  # torch InstanceNorm2d default eps


# --------------------------------------------------------------------------
# static helpers (resolved at trace time inside kernels)
# --------------------------------------------------------------------------
def _apply_act(x, activation):
    if activation == "none":
        return x
    if activation == "relu":
        return jnp.maximum(x, 0.0)
    if activation == "sigmoid":
        return jax.nn.sigmoid(x)
    if activation == "tanh":
        return jnp.tanh(x)
    if activation == "lrelu_0.01":          # nn.LeakyReLU() default slope
        return jnp.where(x >= 0, x, 0.01 * x)
    if activation == "lrelu_0.2":
        return jnp.where(x >= 0, x, 0.2 * x)
    raise ValueError(f"unknown activation {activation}")


def _round_up(x, m):
    return ((x + m - 1) // m) * m


def _make_tap_masks(h, w, kh, kw):
    """Per-tap boundary masks (kh*kw, 1, H*W) f32: 1 where the shifted source
    pixel is inside the image ('same' zero padding), 0 otherwise."""
    hw = h * w
    cy, cx = kh // 2, kw // 2
    masks = np.ones((kh * kw, 1, hw), np.float32)
    for ky in range(kh):
        for kx in range(kw):
            dy, dx = ky - cy, kx - cx
            m = np.ones((h, w), np.float32)
            if dy > 0:
                m[h - dy:, :] = 0.0
            if dy < 0:
                m[:-dy, :] = 0.0
            if dx > 0:
                m[:, w - dx:] = 0.0
            if dx < 0:
                m[:, :-dx] = 0.0
            masks[ky * kw + kx, 0] = m.reshape(hw)
    return masks


def _vmem_limit(est_bytes):
    """Only override the default scoped-VMEM limit when the footprint is big;
    clamp to 64 MiB so the value is valid on v7x (64 MiB physical) too."""
    if est_bytes < (8 << 20):
        return None
    return int(min(2 * est_bytes, 64 << 20))


# --------------------------------------------------------------------------
# conv2d in channel-major layout (stride 1, 'same' padding, odd kernel / 1x1)
#   input block  : (1, cin_p, HW)    -- whole image, channel-major, bf16
#   weight block : (cout_p, kh*kw*cin_p) -- resident for the whole grid, bf16
#   masks block  : (kh*kw, 1, HW)    -- static boundary masks, resident
#   output block : (1, cout_p, HW)   -- lane-dense (lanes = pixels)
# fused epilogue:  y = post_act( act(acc + bias) [* mul] [+ add] [+ add2] )
# --------------------------------------------------------------------------
def _conv_kernel(*refs, H, W, kh, kw, act, post_act,
                 has_mask, has_mul, has_add, has_add2):
    idx = 0
    x_ref = refs[idx]; idx += 1
    w_ref = refs[idx]; idx += 1
    b_ref = refs[idx]; idx += 1
    mask_ref = mul_ref = add_ref = add2_ref = None
    if has_mask:
        mask_ref = refs[idx]; idx += 1
    if has_mul:
        mul_ref = refs[idx]; idx += 1
    if has_add:
        add_ref = refs[idx]; idx += 1
    if has_add2:
        add2_ref = refs[idx]; idx += 1
    o_ref = refs[idx]

    HW = H * W
    if kh == 1 and kw == 1:
        # 1x1 conv: no taps, feed the bf16 image straight to the MXU.
        xs_all = x_ref[0]                                       # (cin_p, HW)
    else:
        x = x_ref[0].astype(jnp.float32)                        # (cin_p, HW)
        cy, cx = kh // 2, kw // 2
        parts = []
        for ky in range(kh):                                    # static unroll
            for kx in range(kw):
                dy, dx = ky - cy, kx - cx
                s = dy * W + dx                                 # flat pixel shift
                shift = (-s) % HW
                xs = pltpu.roll(x, shift, 1) if shift else x    # lane roll (XLU)
                if dy != 0 or dx != 0:
                    xs = xs * mask_ref[ky * kw + kx]            # (1, HW) bcast
                parts.append(xs)
        # Fold the taps into the contraction dim: one K = kh*kw*cin_p matmul.
        xs_all = jnp.concatenate(parts, axis=0).astype(jnp.bfloat16)

    acc = jnp.dot(w_ref[...], xs_all,
                  preferred_element_type=jnp.float32)           # (cout_p, HW)
    y = _apply_act(acc + b_ref[...], act)
    if has_mul:
        y = y * mul_ref[0].astype(jnp.float32)
    if has_add:
        y = y + add_ref[0].astype(jnp.float32)
    if has_add2:
        y = y + add2_ref[0].astype(jnp.float32)
    y = _apply_act(y, post_act)
    o_ref[0] = y.astype(o_ref.dtype)


@functools.partial(jax.jit,
                   static_argnames=("H", "W", "activation", "post_activation"))
def conv2d_cm(x, w, b, *, H, W, activation="none", mul=None, add=None,
              add2=None, post_activation="none"):
    """2-D conv (stride 1, 'same' padding) in channel-major layout.

    x is (N, Cin, H*W); returns (N, Cout, H*W) bf16.
    `mul` (1 or Cout channels) and `add`/`add2` (Cout channels) are optional
    (N, C, H*W) arrays fused into the epilogue."""
    N, Cin, HW = (int(s) for s in x.shape)
    Cout, CinW, kh, kw = (int(s) for s in w.shape)
    assert CinW == Cin and HW == H * W
    cin_p = _round_up(Cin, 8)
    cout_p = _round_up(Cout, 8)
    K = kh * kw * cin_p

    xb = x.astype(jnp.bfloat16)
    if cin_p != Cin:
        xb = jnp.pad(xb, ((0, 0), (0, cin_p - Cin), (0, 0)))
    wk = jnp.transpose(w, (0, 2, 3, 1))                      # (Cout, kh, kw, Cin)
    wk = jnp.pad(wk, ((0, cout_p - Cout), (0, 0), (0, 0), (0, cin_p - Cin)))
    wk = wk.reshape(cout_p, K).astype(jnp.bfloat16)
    bp = jnp.pad(b.astype(jnp.float32), (0, cout_p - Cout)).reshape(cout_p, 1)

    operands = [xb, wk, bp]
    in_specs = [
        pl.BlockSpec((1, cin_p, HW), lambda n: (n, 0, 0)),
        pl.BlockSpec((cout_p, K), lambda n: (0, 0)),
        pl.BlockSpec((cout_p, 1), lambda n: (0, 0)),
    ]

    has_mask = kh * kw > 1
    if has_mask:
        operands.append(jnp.asarray(_make_tap_masks(H, W, kh, kw)))
        in_specs.append(pl.BlockSpec((kh * kw, 1, HW), lambda n: (0, 0, 0)))

    def _prep(extra):
        e = extra.astype(jnp.bfloat16)
        ce = int(e.shape[1])
        if ce != 1 and ce != cout_p:
            e = jnp.pad(e, ((0, 0), (0, cout_p - ce), (0, 0)))
            ce = cout_p
        operands.append(e)
        in_specs.append(pl.BlockSpec((1, ce, HW), lambda n: (n, 0, 0)))

    has_mul = mul is not None
    has_add = add is not None
    has_add2 = add2 is not None
    if has_mul:
        _prep(mul)
    if has_add:
        _prep(add)
    if has_add2:
        _prep(add2)

    # VMEM estimate: double-buffered image / output / epilogue blocks (bf16)
    # + resident weights & masks + in-kernel f32/bf16 tap buffer + accumulator.
    n_extra = int(has_mul) + int(has_add) + int(has_add2)
    blk = (cin_p + cout_p * (1 + n_extra)) * HW * 2
    temps = K * HW * 6 + cout_p * HW * 4
    est = 2 * blk + cout_p * (K + 2) * 2 + kh * kw * HW * 4 + temps
    # TODO(synk): for very large images (whole channel-major image block no
    # longer fits VMEM) add a row-tiled halo path (memory_space=pl.ANY +
    # make_async_copy of th+kh-1 rows).

    out = pl.pallas_call(
        functools.partial(_conv_kernel, H=H, W=W, kh=kh, kw=kw,
                          act=activation, post_act=post_activation,
                          has_mask=has_mask, has_mul=has_mul,
                          has_add=has_add, has_add2=has_add2),
        out_shape=jax.ShapeDtypeStruct((N, cout_p, HW), jnp.bfloat16),
        grid_spec=pltpu.PrefetchScalarGridSpec(
            num_scalar_prefetch=0,
            grid=(N,),
            in_specs=in_specs,
            out_specs=pl.BlockSpec((1, cout_p, HW), lambda n: (n, 0, 0)),
        ),
        compiler_params=pltpu.CompilerParams(
            dimension_semantics=("parallel",),
            vmem_limit_bytes=_vmem_limit(est)),
    )(*operands)
    if cout_p != Cout:
        out = out[:, :Cout, :]
    return out


# --------------------------------------------------------------------------
# InstanceNorm2d(affine=False) in channel-major layout, with optional fused
# (1 - gate) pre-scale and fused output activation:
#     act( IN( (1 - gate) * x ) )   per (image, channel)
# mean / var are lane (XLU) reductions over the pixel axis.
# --------------------------------------------------------------------------
def _in_kernel(*refs, eps, act, has_gate):
    if has_gate:
        x_ref, g_ref, o_ref = refs
        x = (1.0 - g_ref[0].astype(jnp.float32)) * x_ref[0].astype(jnp.float32)
    else:
        x_ref, o_ref = refs
        x = x_ref[0].astype(jnp.float32)                        # (C, HW)
    mean = jnp.mean(x, axis=1, keepdims=True)
    xc = x - mean
    var = jnp.mean(xc * xc, axis=1, keepdims=True)              # biased, like torch
    y = xc * jax.lax.rsqrt(var + eps)
    o_ref[0] = _apply_act(y, act).astype(o_ref.dtype)


@functools.partial(jax.jit, static_argnames=("activation",))
def instance_norm_cm(x, *, activation="none", gate=None):
    """x, gate: (N, C, H*W); returns (N, C, H*W) bf16."""
    N, C, HW = (int(s) for s in x.shape)
    operands = [x.astype(jnp.bfloat16)]
    in_specs = [pl.BlockSpec((1, C, HW), lambda n: (n, 0, 0))]
    has_gate = gate is not None
    if has_gate:
        operands.append(gate.astype(jnp.bfloat16))
        in_specs.append(pl.BlockSpec((1, C, HW), lambda n: (n, 0, 0)))

    est = (2 + 2 * int(has_gate) + 2) * C * HW * 2 + C * HW * 8
    # TODO(synk): for very large C*HW add an HW-tiled two-pass (sum/sumsq then
    # normalize) variant to bound VMEM on v7x.

    return pl.pallas_call(
        functools.partial(_in_kernel, eps=EPS, act=activation,
                          has_gate=has_gate),
        out_shape=jax.ShapeDtypeStruct((N, C, HW), jnp.bfloat16),
        grid_spec=pltpu.PrefetchScalarGridSpec(
            num_scalar_prefetch=0,
            grid=(N,),
            in_specs=in_specs,
            out_specs=pl.BlockSpec((1, C, HW), lambda n: (n, 0, 0)),
        ),
        compiler_params=pltpu.CompilerParams(
            dimension_semantics=("parallel",),
            vmem_limit_bytes=_vmem_limit(est)),
    )(*operands)


# --------------------------------------------------------------------------
# F.interpolate(mode='nearest')  (pure index glue, torch float-scale semantics)
# --------------------------------------------------------------------------
@functools.partial(jax.jit, static_argnames=("size",))
def interpolate_nearest(x, *, size):
    n, c, hin, win = (int(s) for s in x.shape)
    hout, wout = size
    hi = jnp.minimum(jnp.floor(
        jnp.arange(hout, dtype=jnp.float32) * (hin / hout)).astype(jnp.int32),
        hin - 1)
    wi = jnp.minimum(jnp.floor(
        jnp.arange(wout, dtype=jnp.float32) * (win / wout)).astype(jnp.int32),
        win - 1)
    return x[:, :, hi[:, None], wi[None, :]]


# --------------------------------------------------------------------------
# parameter init (deterministic, synthetic)
# --------------------------------------------------------------------------
def _conv_init(key, cout, cin, ksize):
    kw_, kb_ = jax.random.split(key)
    fan_in = cin * ksize * ksize
    w = jax.random.normal(kw_, (cout, cin, ksize, ksize), jnp.float32) / jnp.sqrt(
        jnp.float32(fan_in))
    b = 0.01 * jax.random.normal(kb_, (cout,), jnp.float32)
    return {"w": w, "b": b}


# ------------------------------- User_norm ---------------------------------
def init_user_norm(key, label_nc, norm_nc, hidden, noise_in=True):
    k0, k1, k2 = jax.random.split(key, 3)
    in_c = label_nc * 2 if noise_in else label_nc
    return {"noise_in": noise_in,
            "mlp_shared": _conv_init(k0, hidden, in_c, 3),
            "mlp_gamma": _conv_init(k1, norm_nc, hidden, 3),
            "mlp_beta": _conv_init(k2, norm_nc, hidden, 3)}


def user_norm_fwd(p, x_cm, guide_cm, noise, *, H, W, post_act="none"):
    """SPADE:  post_act( IN(x) * (1 + sigmoid(conv_g(a))) + conv_b(a) ),
    a = relu(conv_shared(guide)).  The modulation (mul & add of `normalized`)
    and the caller's activation are fused into the conv epilogues."""
    # TODO(synk): noise_in=True branch (interpolate + concat noise) is unused
    # by UserResnetBlock_color and is not implemented here.
    assert not p["noise_in"]
    del noise
    normalized = instance_norm_cm(x_cm)
    actv = conv2d_cm(guide_cm, p["mlp_shared"]["w"], p["mlp_shared"]["b"],
                     H=H, W=W, activation="relu")
    # modulation = normalized * (1 + sigmoid(gamma)) fused into the gamma conv.
    modulation = conv2d_cm(actv, p["mlp_gamma"]["w"], p["mlp_gamma"]["b"],
                           H=H, W=W, activation="sigmoid",
                           mul=normalized, add=normalized)
    return conv2d_cm(actv, p["mlp_beta"]["w"], p["mlp_beta"]["b"],
                     H=H, W=W, add=modulation, post_activation=post_act)


# --------------------------- UserResnetBlock_color --------------------------
def init_color_block(key, fin, fout):
    ks = jax.random.split(key, 7)
    return {
        "gated_conv1": _conv_init(ks[0], fout, 1, 3),
        "gated_conv2": _conv_init(ks[1], fout, fout, 3),
        "convcolor_f": _conv_init(ks[2], fout, fout, 3),
        "convcolor":   _conv_init(ks[3], fout, fin, 3),
        "color_to_f":  _conv_init(ks[4], fout, 3, 1),
        "convn":       _conv_init(ks[5], fout, fin, 3),
        "norm":        init_user_norm(ks[6], fin, fout, fout // 2,
                                      noise_in=False),
    }


def color_block_fwd(p, x, user_skrtch, user_color, noise, mask):
    """Forward of UserResnetBlock_color.  Returns (out, user_color_f, gated_se)
    in NCHW f32, matching the PyTorch module."""
    N, Cx, H, W = (int(s) for s in x.shape)
    HW = H * W
    fout = int(p["convn"]["w"].shape[0])
    c_col = int(user_color.shape[1])

    # NCHW -> channel-major (N, C, HW) is a free reshape (no transpose).
    x_cm = x.reshape(N, Cx, HW)
    sk_cm = user_skrtch.reshape(N, 1, HW)

    # --- gated_se = Sigmoid(Conv(ReLU(IN(Conv(ReLU(IN(sketch))))))) ---------
    g = instance_norm_cm(sk_cm, activation="relu")
    g = conv2d_cm(g, p["gated_conv1"]["w"], p["gated_conv1"]["b"], H=H, W=W)
    g = instance_norm_cm(g, activation="relu")
    gated_se = conv2d_cm(g, p["gated_conv2"]["w"], p["gated_conv2"]["b"],
                         H=H, W=W, activation="sigmoid")

    # --- dx = x + convn(lrelu_0.01(IN(x))) * gated_se  (fused in conv) ------
    fx = instance_norm_cm(x_cm, activation="lrelu_0.01")
    dx = conv2d_cm(fx, p["convn"]["w"], p["convn"]["b"], H=H, W=W,
                   mul=gated_se, add=x_cm)

    # --- user_color_f = lrelu_0.2(IN((1-gated_se) * convcolor_f(ucf*mask))) -
    mask_cm = interpolate_nearest(mask, size=(H, W)).reshape(N, 1, HW)
    if c_col == 3:
        uc = interpolate_nearest(user_color, size=(H, W)).reshape(N, 3, HW)
        # mask multiply fused into the 1x1 conv epilogue.
        ucf_masked = conv2d_cm(uc, p["color_to_f"]["w"], p["color_to_f"]["b"],
                               H=H, W=W, mul=mask_cm)
    else:
        ucf_masked = (user_color.reshape(N, c_col, HW).astype(jnp.bfloat16)
                      * mask_cm.astype(jnp.bfloat16))
    ucf_conv = conv2d_cm(ucf_masked, p["convcolor_f"]["w"],
                         p["convcolor_f"]["b"], H=H, W=W)
    user_color_f = instance_norm_cm(ucf_conv, activation="lrelu_0.2",
                                    gate=gated_se)

    # --- out = x + dx + convcolor(lrelu_0.2(User_norm(dx, user_color_f))) ---
    h = user_norm_fwd(p["norm"], dx, user_color_f, noise,
                      H=H, W=W, post_act="lrelu_0.2")
    out_cm = conv2d_cm(h, p["convcolor"]["w"], p["convcolor"]["b"],
                       H=H, W=W, add=x_cm, add2=dx)

    out = out_cm.reshape(N, fout, H, W).astype(jnp.float32)
    user_color_f_o = user_color_f.reshape(N, fout, H, W).astype(jnp.float32)
    gated_se_o = gated_se.reshape(N, fout, H, W).astype(jnp.float32)
    return out, user_color_f_o, gated_se_o


# --------------------------------------------------------------------------
if __name__ == "__main__":
    root = jax.random.PRNGKey(0)
    k_param, k_in = jax.random.split(root)

    fin = fout = 32          # the block requires fin == fout (residual adds)
    N, H, W = 2, 16, 16
    params = init_color_block(k_param, fin, fout)

    ks = jax.random.split(k_in, 5)
    x = jax.random.normal(ks[0], (N, fin, H, W), jnp.float32)
    user_sketch = jax.random.normal(ks[1], (N, 1, H, W), jnp.float32)
    user_color = jax.random.normal(ks[2], (N, 3, 8, 8), jnp.float32)
    noise = jax.random.normal(ks[3], (N, 3, H, W), jnp.float32)
    mask = (jax.random.uniform(ks[4], (N, 1, 8, 8)) > 0.5).astype(jnp.float32)

    out, user_color_f, gated_se = color_block_fwd(
        params, x, user_sketch, user_color, noise, mask)
    jax.block_until_ready((out, user_color_f, gated_se))
    print("KERNEL_OK")
</pallas_src>

<mosaic_0001>
module attributes {stable_mosaic.version = 11 : i64} {
  func.func @_in_kernel(%arg0: i32, %arg1: memref<1x1x256xbf16, #tpu.memory_space<vmem>>, %arg2: memref<1x1x256xbf16, #tpu.memory_space<vmem>>) attributes {dimension_semantics = [#tpu.dimension_semantics<parallel>], iteration_bounds = array<i64: 2>, scalar_prefetch = 0 : i64, scratch_operands = 0 : i64, tpu.core_type = #tpu.core_type<tc>, window_params = [{transform_indices = @transform_0, window_bounds = array<i64: 1, 1, 256>}, {transform_indices = @transform_1, window_bounds = array<i64: 1, 1, 256>}]} {
    %c0 = arith.constant 0 : index
    %c0_0 = arith.constant 0 : index
    %c0_1 = arith.constant 0 : index
    %0 = vector.load %arg1[%c0, %c0_0, %c0_1] : memref<1x1x256xbf16, #tpu.memory_space<vmem>>, vector<1x1x256xbf16>
    %1 = vector.shape_cast %0 : vector<1x1x256xbf16> to vector<1x256xbf16>
    %2 = arith.extf %1 : vector<1x256xbf16> to vector<1x256xf32>
    %cst = arith.constant dense<0.000000e+00> : vector<1xf32>
    %3 = vector.multi_reduction <add>, %2, %cst [1] : vector<1x256xf32> to vector<1xf32>
    %4 = vector.shape_cast %3 : vector<1xf32> to vector<1x1xf32>
    %cst_2 = arith.constant 2.560000e+02 : f32
    %5 = vector.broadcast %cst_2 : f32 to vector<1x1xf32>
    %6 = arith.divf %4, %5 : vector<1x1xf32>
    %7 = vector.broadcast %6 : vector<1x1xf32> to vector<1x256xf32>
    %8 = arith.subf %2, %7 : vector<1x256xf32>
    %9 = arith.mulf %8, %8 : vector<1x256xf32>
    %cst_3 = arith.constant dense<0.000000e+00> : vector<1xf32>
    %10 = vector.multi_reduction <add>, %9, %cst_3 [1] : vector<1x256xf32> to vector<1xf32>
    %11 = vector.shape_cast %10 : vector<1xf32> to vector<1x1xf32>
    %cst_4 = arith.constant 2.560000e+02 : f32
    %12 = vector.broadcast %cst_4 : f32 to vector<1x1xf32>
    %13 = arith.divf %11, %12 : vector<1x1xf32>
    %cst_5 = arith.constant 9.99999974E-6 : f32
    %14 = vector.broadcast %cst_5 : f32 to vector<1x1xf32>
    %15 = arith.addf %13, %14 : vector<1x1xf32>
    %16 = math.rsqrt %15 : vector<1x1xf32>
    %17 = vector.broadcast %16 : vector<1x1xf32> to vector<1x256xf32>
    %18 = arith.mulf %8, %17 : vector<1x256xf32>
    %cst_6 = arith.constant 0.000000e+00 : f32
    %19 = vector.broadcast %cst_6 : f32 to vector<1x256xf32>
    %20 = arith.maximumf %18, %19 : vector<1x256xf32>
    %21 = arith.truncf %20 : vector<1x256xf32> to vector<1x256xbf16>
    %c0_7 = arith.constant 0 : index
    %c0_8 = arith.constant 0 : index
    %c0_9 = arith.constant 0 : index
    %22 = vector.load %arg2[%c0_7, %c0_8, %c0_9] : memref<1x1x256xbf16, #tpu.memory_space<vmem>>, vector<1x1x256xbf16>
    %23 = vector.shape_cast %22 : vector<1x1x256xbf16> to vector<1x256xbf16>
    %24 = vector.shape_cast %21 : vector<1x256xbf16> to vector<1x1x256xbf16>
    tpu.vector_store %arg2[%c0_7, %c0_8, %c0_9], %24 {strides = array<i32>} : memref<1x1x256xbf16, #tpu.memory_space<vmem>>, vector<1x1x256xbf16>,
    return
  }
  func.func @transform_0(%arg0: i32) -> (i32, i32, i32) {
    %c0_i32 = arith.constant 0 : i32
    %c0_i32_0 = arith.constant 0 : i32
    %c0_i32_1 = arith.constant 0 : i32
    return %arg0, %c0_i32, %c0_i32_0 : i32, i32, i32
  }
  func.func @transform_1(%arg0: i32) -> (i32, i32, i32) {
    %c0_i32 = arith.constant 0 : i32
    %c0_i32_0 = arith.constant 0 : i32
    %c0_i32_1 = arith.constant 0 : i32
    return %arg0, %c0_i32, %c0_i32_0 : i32, i32, i32
  }
}

</mosaic_0001>

<llo_original>
// kernel: instance_norm_cm.1
$region0: #{instance_norm_cm.1}
  #allocation0 [shape = 'u32[]', space=smem, size = 0x4, offset = 0x4, fixed_abs, tag = 'smem constant byte address 0x4 - core index']
  #allocation1 [shape = 'u32[144,128]{1,0:T(1,128)}', space=vmem, size = 0x12000, scoped, tag = 'internal scratch']
  %s0 = inlined_call_operand.vmem [shape: bf16[2,1,256], index: 0, kind: input, shape index: {}]
  %s1 = inlined_call_operand.vmem [shape: bf16[2,1,256], index: 1, kind: output, shape index: {}]
  %s2 = sld [smem:[#allocation0]]
  $region37: #{instance_norm_cm.1} parent=0
    _
  %s4 = ssub.s32 1, %s2
  %s5 = scalar_select 0, %s4, %s2
  loop: start=0, step=1, limit=4
  $region2: #{instance_norm_cm.1} parent=0 // loop_pre_header
    _
  $region3: #{instance_norm_cm.1} parent=0 // loop_header
    %s7 = sphi 0, %s11
    %p8 = scmp.ge.s32.totalorder %s7, 4
    %s17 = sphi 0, %s19
    %s20 = sphi 0, %s17
    %s21 = sphi 0, %s20
    %s37 = sphi 0, %s21
    %s43 = sphi 0, %s45
    %s46 = sphi 0, %s43
    %s47 = sphi 0, %s46
    %s63 = sphi 0, %s47
  $region4: #{instance_norm_cm.1} parent=0 // loop_header_branch
    %10 = sbr.rel (%p8) target = $region8
  $region5: #{instance_norm_cm.1} parent=0 // loop_body
    %s12 = ssub.s32 %s7, 1
    %s13 = ssub.s32 %s7, 2
    %s14 = sadd.s32 %s7, 1
    %s15 = ssub.s32 %s7, %s14
    %p16 = scmp.eq.s32.totalorder %s15, 0
    %s18 = sadd.s32 %s17, 1
    %s19 = scalar_select %p16, %s17, %s18
    %p22 = pneg %p16
    %p23 = scmp.eq.s32.totalorder %s7, 1
    %p24 = por %p22, %p23
    %p25 = scmp.ne.s32.totalorder %s17, %s20
    %p26 = scmp.eq.s32.totalorder %s7, 0
    %p27 = por %p25, %p26
    %p28 = scmp.ne.s32.totalorder %s17, %s20
    %p29 = scmp.eq.s32.totalorder %s12, 1
    %p30 = por %p28, %p29
    %p31 = scmp.ne.s32.totalorder %s20, %s21
    %p32 = scmp.eq.s32.totalorder %s12, 0
    %p33 = por %p31, %p32
    %p34 = scmp.ne.s32.totalorder %s20, %s21
    %p35 = scmp.eq.s32.totalorder %s13, 1
    %p36 = por %p34, %p35
    %p38 = scmp.ne.s32.totalorder %s21, %s37
    %p39 = scmp.eq.s32.totalorder %s13, 0
    %p40 = por %p38, %p39
    %s41 = ssub.s32 %s7, %s14
    %p42 = scmp.eq.s32.totalorder %s41, 0
    %s44 = sadd.s32 %s43, 1
    %s45 = scalar_select %p42, %s43, %s44
    %p48 = pneg %p42
    %p49 = scmp.eq.s32.totalorder %s7, 1
    %p50 = por %p48, %p49
    %p51 = scmp.ne.s32.totalorder %s43, %s46
    %p52 = scmp.eq.s32.totalorder %s7, 0
    %p53 = por %p51, %p52
    %p54 = scmp.ne.s32.totalorder %s43, %s46
    %p55 = scmp.eq.s32.totalorder %s12, 1
    %p56 = por %p54, %p55
    %p57 = scmp.ne.s32.totalorder %s46, %s47
    %p58 = scmp.eq.s32.totalorder %s12, 0
    %p59 = por %p57, %p58
    %p60 = scmp.ne.s32.totalorder %s46, %s47
    %p61 = scmp.eq.s32.totalorder %s13, 1
    %p62 = por %p60, %p61
    %p64 = scmp.ne.s32.totalorder %s47, %s63
    %p65 = scmp.eq.s32.totalorder %s13, 0
    %p66 = por %p64, %p65
    %p67 = scmp.le.s32.totalorder 1, %s7
    %p68 = scmp.lt.s32.totalorder %s7, 3
    %p69 = pnand %p67, %p68
    %p70 = pneg %p69
    // Predicated region
    $region9: #{instance_norm_cm.1} parent=5 // pred_check
      _
    $region10: #{instance_norm_cm.1} parent=5 // pred_check_branch
      %72 = sbr.rel (%p69) target = $region12
    $region11: #{instance_norm_cm.1} parent=5 // pred_region
      %s73 = ssub.s32 %s7, 1
    $region12: #{instance_norm_cm.1} parent=5 // pred_fallthru
      _
    %p74 = scmp.lt.s32.totalorder %s7, 2
    // Predicated region
    $region13: #{instance_norm_cm.1} parent=5 // pred_check
      %p75 = pneg %p74
    $region14: #{instance_norm_cm.1} parent=5 // pred_check_branch
      %77 = sbr.rel (%p75) target = $region16
    $region15: #{instance_norm_cm.1} parent=5 // pred_region
      // Predicated region
      $region17: #{instance_norm_cm.1} parent=15 // pred_check
        %p78 = pneg %p27
      $region18: #{instance_norm_cm.1} parent=15 // pred_check_branch
        %80 = sbr.rel (%p78) target = $region20
      $region19: #{instance_norm_cm.1} parent=15 // pred_region
        %p81 = scmp.lt.s32.totalorder %s7, 1
        %s82 = scalar_select %p81, %s7, 1
        %s83 = smul.addr %s82, 2
        %s84 = scalar_lea.vmem %s0, %s83
      $region20: #{instance_norm_cm.1} parent=15 // pred_fallthru
        _
    $region16: #{instance_norm_cm.1} parent=5 // pred_fallthru
      _
    %p85 = scmp.le.s32.totalorder 1, %s7
    %p86 = scmp.lt.s32.totalorder %s7, 3
    %p87 = pnand %p85, %p86
    %p88 = pneg %p87
    // Predicated region
    $region21: #{instance_norm_cm.1} parent=5 // pred_check
      _
    $region22: #{instance_norm_cm.1} parent=5 // pred_check_branch
      %90 = sbr.rel (%p87) target = $region24
    $region23: #{instance_norm_cm.1} parent=5 // pred_region
      %s91 = ssub.s32 %s7, 1
      %p92 = scmp.lt.s32.totalorder %s12, 1
      %s93 = scalar_select %p92, %s12, 1
      %s94 = smul.addr %s93, 2
      %s95 = scalar_lea.vmem %s0, %s94
      %p96 = pneg %p33
      %p97 = pneg %p30
      %p98 = pneg %p59
      %p99 = pneg %p56
      %p100 = scmp.lt.s32.totalorder %s12, 1
      %s101 = scalar_select %p100, %s12, 1
      %s102 = smul.addr %s101, 2
      %s103 = scalar_lea.vmem %s1, %s102
      %p104 = scmp.lt.s32.totalorder %s12, 1
      %s105 = scalar_select %p104, %s12, 1
      %s106 = smul.addr %s105, 2
      %s107 = scalar_lea.vmem %s0, %s106
      %p108 = scmp.lt.s32.totalorder %s12, 1
      %s109 = scalar_select %p108, %s12, 1
      %s110 = smul.addr %s109, 2
      %s111 = scalar_lea.vmem %s1, %s110
      %v112 = vld [vmem:[%s107] sm:$0x3]
      %v113 = vunpack.c.l.bf16 %v112
      %v115 = vlaneseq
      %v116 = vshrl.u32 %v115, 7
      %v117 = vsub.s32 0, %v116
      %v118 = vrot.slane %v113, %v117
      %v119 = vlaneseq
      %v120 = vshrl.u32 %v119, 7
      %v121 = vsub.s32 2, %v120
      %v122 = vrot.slane %v113, %v121
      %vm125 = vcmask 1040384
      %v126 = vsel %vm125, %v118, 0.0
      %v127 = vsel %vm125, %v122, 0.0
      %v128 = vadd.f32 %v126, %v127
      %129 = vadd.xlane.f32.xlu0 %v128
      %v130 = vpop.xlane.xlu0 %129
      %v131 = vrcp.pop 256.0
      %v132 = vmul.f32 %v130, %v131
      %v135 = vunpack.c.l.s4 269488144
      %v136 = vunpack.c.0.s8 %v135
      %v137 = vlaneseq
      %v138 = vshrl.u32 %v137, 7
      %v139 = vsub.s32 %v136, %v138
      %v140 = vrot.slane %v132, %v139
      %v142 = vsub.f32 %v113, %v140
      %v143 = vmul.f32 %v142, %v142
      %v145 = vlaneseq
      %v146 = vshrl.u32 %v145, 7
      %v147 = vsub.s32 0, %v146
      %v148 = vrot.slane %v143, %v147
      %v149 = vlaneseq
      %v150 = vshrl.u32 %v149, 7
      %v151 = vsub.s32 2, %v150
      %v152 = vrot.slane %v143, %v151
      %v155 = vsel %vm125, %v148, 0.0
      %v156 = vsel %vm125, %v152, 0.0
      %v157 = vadd.f32 %v155, %v156
      %158 = vadd.xlane.f32.xlu0 %v157
      %v159 = vpop.xlane.xlu0 %158
      %v160 = vmul.f32 %v159, %v131
      %v161 = vadd.f32 %v160, 1e-05
      %v162 = vrsqrt.pop %v161
      %v165 = vunpack.c.l.s4 269488144
      %v166 = vunpack.c.0.s8 %v165
      %v167 = vlaneseq
      %v168 = vshrl.u32 %v167, 7
      %v169 = vsub.s32 %v166, %v168
      %v170 = vrot.slane %v162, %v169
      %v172 = vmul.f32 %v142, %v170
      %v173 = vmax.f32 %v172, 0.0
      %v175 = vlaneseq
      %v176 = vshrl.u32 %v175, 7
      %v177 = vsub.s32 0, %v176
      %v178 = vrot.slane %v173, %v177
      %v179 = vlaneseq
      %v180 = vshrl.u32 %v179, 7
      %v181 = vsub.s32 2, %v180
      %v182 = vrot.slane %v173, %v181
      %v185 = vpack.c.bf16 %v178, %v178
      %v186 = vpack.c.bf16 %v182, %v182
      %v189 = vcombine.low %v185, %v186
      %v191 = vunpack.c.l.s4 1966171168
      %v192 = vunpack.c.0.s8 %v191
      %v193 = vlaneseq
      %v194 = vshrl.u32 %v193, 7
      %v195 = vsub.s32 %v192, %v194
      %v196 = vrot.slane %v189, %v195
      %v198 = vunpack.c.l.s4 1966171168
      %v199 = vunpack.c.0.s8 %v198
      %v200 = vlaneseq
      %v201 = vshrl.u32 %v200, 7
      %v202 = vsub.s32 %v199, %v201
      %v203 = vrot.slane %v196, %v202
      %vm205 = vcmask 1040384
      %vm206 = vsmask.f32 256
      %vm207 = vmand %vm205, %vm206
      %vm208 = vcmask 1041409
      %vm209 = vsmask.f32 1280
      %vm210 = vmand %vm208, %vm209
      %vm211 = vmor %vm210, %vm207
      %v212 = vld [vmem:[%s111] sm:$0x3]
      %v213 = vsel %vm211, %v203, %v212
      %214 = vst [vmem:[%s111] sm:$0x3] %v213
      %p215 = scmp.lt.s32.totalorder %s12, 1
      %s216 = scalar_select %p215, %s12, 1
      %s217 = smul.addr %s216, 2
      %s218 = scalar_lea.vmem %s1, %s217
      // Predicated region
      $region25: #{instance_norm_cm.1} parent=23 // pred_check
        %p219 = pneg %p56
      $region26: #{instance_norm_cm.1} parent=23 // pred_check_branch
        %221 = sbr.rel (%p219) target = $region28
      $region27: #{instance_norm_cm.1} parent=23 // pred_region
        _
      $region28: #{instance_norm_cm.1} parent=23 // pred_fallthru
        _
    $region24: #{instance_norm_cm.1} parent=5 // pred_fallthru
      _
    %p222 = scmp.le.s32.totalorder 2, %s7
    // Predicated region
    $region29: #{instance_norm_cm.1} parent=5 // pred_check
      %p223 = pneg %p222
    $region30: #{instance_norm_cm.1} parent=5 // pred_check_branch
      %225 = sbr.rel (%p223) target = $region32
    $region31: #{instance_norm_cm.1} parent=5 // pred_region
      %s226 = ssub.s32 %s7, 2
      // Predicated region
      $region33: #{instance_norm_cm.1} parent=31 // pred_check
        %p227 = pneg %p62
      $region34: #{instance_norm_cm.1} parent=31 // pred_check_branch
        %229 = sbr.rel (%p227) target = $region36
      $region35: #{instance_norm_cm.1} parent=31 // pred_region
        %p230 = scmp.lt.s32.totalorder %s13, 1
        %s231 = scalar_select %p230, %s13, 1
        %s232 = smul.addr %s231, 2
        %s233 = scalar_lea.vmem %s1, %s232
      $region36: #{instance_norm_cm.1} parent=31 // pred_fallthru
        _
    $region32: #{instance_norm_cm.1} parent=5 // pred_fallthru
      _
  $region6: #{instance_norm_cm.1} parent=0 // loop_footer
    %s11 = sadd.s32 1, %s7
  $region7: #{instance_norm_cm.1} parent=0 // loop_footer_branch
    %6 = sbr.rel target = $region3
  $region8: #{instance_norm_cm.1} parent=0 // loop_exit
    _

</llo_original>
